<compile_context>
chip_gen: v5e
topology: v5e:2x2
jax: 0.10.0
libtpu: 0.0.40
codegen_flags: <defaults>
</compile_context>

<pallas_src>
import math

import jax
import jax.numpy as jnp
from jax.experimental import pallas as pl
from jax.experimental.pallas import tpu as pltpu


def _round_up(x, m):
    return ((x + m - 1) // m) * m


def _cdiv(a, b):
    return (a + b - 1) // b


# --------------------------------------------------------------------------- kernel
def _ffn_kernel(x_ref, w1_ref, b1_ref, w2_ref, b2_ref, o_ref, acc_ref):
    """One (row-tile, d_ff-tile) step of the positionwise FFN.

    x_ref : (tm, d_model)   VMEM  input rows (original dtype; cast per tile)
    w1_ref: (d_model, tff)  VMEM  d_ff slice of w1^T (compute dtype)
    b1_ref: (1, tff)        VMEM  f32
    w2_ref: (tff, dm_p)     VMEM  d_ff slice of w2^T (compute dtype)
    b2_ref: (1, dm_p)       VMEM  f32
    o_ref : (tm, dm_p)      VMEM  output rows (original dtype)
    acc_ref:(tm, dm_p)      VMEM  f32 accumulator scratch (persists over f)
    """
    f = pl.program_id(1)

    @pl.when(f == 0)
    def _zero_acc():
        acc_ref[...] = jnp.zeros_like(acc_ref)

    # First matmul on this d_ff slice: h_f = relu(x @ w1^T[:, f] + b1[f]), f32 accum.
    x = x_ref[...].astype(w1_ref.dtype)          # per-tile cast; negligible vs two matmuls
    h = jnp.dot(x, w1_ref[...], preferred_element_type=jnp.float32)
    h = jnp.maximum(h + b1_ref[...], 0.0)
    # TODO(synk): dropout is identity here (inference mode); a training-mode version
    # would mask `h` via pltpu.prng_seed/prng_random_bits and scale by 1/(1-p).

    # Second matmul: accumulate this d_ff slice's contribution (cast only the tile).
    acc_ref[...] += jnp.dot(h.astype(w2_ref.dtype), w2_ref[...],
                            preferred_element_type=jnp.float32)

    @pl.when(f == pl.num_programs(1) - 1)
    def _finalize():
        o_ref[...] = (acc_ref[...] + b2_ref[...]).astype(o_ref.dtype)


# --------------------------------------------------------- one-time parameter layout
def prepare_ffn_params(w1, b1, w2, b2, *, compute_dtype=None, d_ff_tile=None):
    """One-time weight prep, hoisted out of the per-call hot path.

    PyTorch nn.Linear layout: w1: [d_ff, d_model], b1: [d_ff],
                              w2: [d_model, d_ff], b2: [d_model].
    Transposes to (in, out), zero-pads d_ff to a multiple of the d_ff tile (so
    padded columns contribute exactly zero to the accumulation) and the output
    d_model to a multiple of 128 (lane-dense stores), and casts MXU operands to
    `compute_dtype` (default bf16 when weights are f32; accumulation is f32).
    """
    d_ff, d_model = w1.shape
    assert w2.shape == (d_model, d_ff) and b1.shape == (d_ff,) and b2.shape == (d_model,)

    if compute_dtype is None:
        compute_dtype = jnp.bfloat16 if w1.dtype == jnp.float32 else w1.dtype
    cdt = jnp.dtype(compute_dtype)

    dm_p = _round_up(d_model, 128)                       # lane-dense output features
    if d_ff_tile is None:
        d_ff_tile = 512                                  # ~a couple MiB of weight tile/step
    tff = min(_round_up(d_ff_tile, 128), _round_up(d_ff, 128))
    dff_p = _round_up(d_ff, tff)                         # multiple of tff -> exact grid

    w1_t = jnp.pad(w1.T, ((0, 0), (0, dff_p - d_ff))).astype(cdt)                # (d_model, dff_p)
    w2_t = jnp.pad(w2.T, ((0, dff_p - d_ff), (0, dm_p - d_model))).astype(cdt)   # (dff_p, dm_p)
    b1_r = jnp.pad(b1.astype(jnp.float32), (0, dff_p - d_ff)).reshape(1, dff_p)
    b2_r = jnp.pad(b2.astype(jnp.float32), (0, dm_p - d_model)).reshape(1, dm_p)

    return dict(w1_t=w1_t, b1=b1_r, w2_t=w2_t, b2=b2_r,
                d_model=d_model, d_ff=d_ff, dm_p=dm_p, dff_p=dff_p, tff=tff,
                compute_dtype=cdt)


# ----------------------------------------------------------------------- hot wrapper
def positionwise_feed_forward(x, params, *, tm_max=None):
    """x: [..., d_model] -> [..., d_model]. `params` from prepare_ffn_params()."""
    d_model = params["d_model"]
    dm_p, dff_p, tff = params["dm_p"], params["dff_p"], params["tff"]
    cdt = params["compute_dtype"]
    assert x.shape[-1] == d_model
    lead = x.shape[:-1]
    N = int(math.prod(lead)) if lead else 1
    orig_dtype = x.dtype

    # Generation-aware knobs (v5e/v6e: 128 MiB VMEM, v7x: 64 MiB per TC).
    try:
        phys_vmem = int(pltpu.get_tpu_info().vmem_capacity_bytes)
    except Exception:
        phys_vmem = 64 * 1024 * 1024                     # conservative (v7x per-TC)

    if tm_max is None:
        tm_max = 512 if phys_vmem >= 100 * 1024 * 1024 else 256

    ROW_ALIGN = 16                                       # safe sublane alignment (f32/bf16)
    tm = min(tm_max, _round_up(N, ROW_ALIGN))
    # v7x has 2 TensorCores: keep >= 2 steps on the 'parallel' row axis whenever the
    # row count allows, so both cores get work (harmless on 1-TC v5e/v6e).
    if _cdiv(N, tm) < 2 and N >= 2 * ROW_ALIGN:
        tm = _round_up(_cdiv(N, 2), ROW_ALIGN)
    n_row = _cdiv(N, tm)                                 # partial last block is masked
    n_ff = dff_p // tff

    # No wrapper-side pad/cast copy of the activation: reshape is free (contiguous),
    # the cast to compute dtype happens per tile inside the kernel.
    x2 = x.reshape(N, d_model)

    itemsize_x = jnp.dtype(orig_dtype).itemsize
    itemsize_c = cdt.itemsize

    # VMEM footprint: double-buffered streamed tiles + f32 accumulator + intermediates.
    vmem_est = (2 * tm * d_model * itemsize_x            # x tile
                + 2 * tm * dm_p * itemsize_x             # out tile
                + 2 * d_model * tff * itemsize_c         # w1^T tile
                + 2 * tff * dm_p * itemsize_c            # w2^T tile
                + 2 * (tff + dm_p) * 4                   # bias tiles
                + tm * dm_p * 4                          # f32 accumulator scratch
                + tm * tff * (4 + itemsize_c))           # f32 h + compute-dtype copy
    # Always set an explicit limit (v5e's default scoped limit is only ~16 MiB), but
    # stay well below physical VMEM to leave headroom for compiler-internal scratch.
    vmem_limit = max(int(vmem_est * 1.5) + (2 << 20), 16 << 20)
    vmem_limit = min(vmem_limit, (3 * phys_vmem) // 4)

    weight_bytes = ((params["w1_t"].size + params["w2_t"].size) * itemsize_c
                    + (params["b1"].size + params["b2"].size) * 4)
    cost = pl.CostEstimate(
        flops=4 * N * d_model * params["d_ff"],          # two matmuls, 2 flops/MAC
        transcendentals=0,
        bytes_accessed=(N * d_model * itemsize_x         # x in
                        + N * dm_p * itemsize_x          # out
                        + n_row * weight_bytes))         # weights re-streamed per row tile

    out = pl.pallas_call(
        _ffn_kernel,
        out_shape=jax.ShapeDtypeStruct((N, dm_p), orig_dtype),
        grid_spec=pltpu.PrefetchScalarGridSpec(
            num_scalar_prefetch=0,
            grid=(n_row, n_ff),                          # reduction (d_ff) axis last
            in_specs=[
                pl.BlockSpec((tm, d_model), lambda i, f: (i, 0)),    # x rows (resident over f)
                pl.BlockSpec((d_model, tff), lambda i, f: (0, f)),   # w1^T d_ff slice
                pl.BlockSpec((1, tff), lambda i, f: (0, f)),         # b1 slice
                pl.BlockSpec((tff, dm_p), lambda i, f: (f, 0)),      # w2^T d_ff slice
                pl.BlockSpec((1, dm_p), lambda i, f: (0, 0)),        # b2 (tiny, constant)
            ],
            out_specs=pl.BlockSpec((tm, dm_p), lambda i, f: (i, 0)),
            scratch_shapes=[pltpu.VMEM((tm, dm_p), jnp.float32)],    # f32 accumulator
        ),
        compiler_params=pltpu.CompilerParams(
            dimension_semantics=("parallel", "arbitrary"),
            vmem_limit_bytes=vmem_limit),
        cost_estimate=cost,
    )(x2, params["w1_t"], params["b1"], params["w2_t"], params["b2"])

    return out[:, :d_model].reshape(lead + (d_model,))


# --------------------------------------------------------------------------- testing
def _init_params(key, d_model, d_ff, dtype=jnp.float32):
    """Deterministic init mirroring nn.Linear's uniform(-1/sqrt(fan_in), +)."""
    k1, k2, k3, k4 = jax.random.split(key, 4)
    lim1 = 1.0 / (d_model ** 0.5)
    lim2 = 1.0 / (d_ff ** 0.5)
    w1 = jax.random.uniform(k1, (d_ff, d_model), dtype, -lim1, lim1)
    b1 = jax.random.uniform(k2, (d_ff,), dtype, -lim1, lim1)
    w2 = jax.random.uniform(k3, (d_model, d_ff), dtype, -lim2, lim2)
    b2 = jax.random.uniform(k4, (d_model,), dtype, -lim2, lim2)
    return w1, b1, w2, b2


def _ref_ffn(x, w1, b1, w2, b2):
    return jnp.maximum(x @ w1.T + b1, 0.0) @ w2.T + b2


if __name__ == "__main__":
    key = jax.random.PRNGKey(0)
    kx, kp, kx2, kp2, kx3 = jax.random.split(key, 5)

    # ---- config 1: small DecoderLayer-like shapes --------------------------------
    B, S, d_model, d_ff = 2, 8, 32, 128
    x = jax.random.normal(kx, (B, S, d_model), jnp.float32)
    w1, b1, w2, b2 = _init_params(kp, d_model, d_ff)
    ref = _ref_ffn(x, w1, b1, w2, b2)

    # Exact f32 compute path.
    params_f32 = prepare_ffn_params(w1, b1, w2, b2, compute_dtype=jnp.float32)
    y = jax.block_until_ready(positionwise_feed_forward(x, params_f32))
    assert y.shape == (B, S, d_model) and y.dtype == x.dtype
    assert jnp.allclose(y, ref, atol=1e-3, rtol=1e-3), "f32 mismatch vs reference"

    # Default bf16 MXU operands (f32 accumulation) -> loosened tolerance.
    params_bf16 = prepare_ffn_params(w1, b1, w2, b2)
    y_bf = jax.block_until_ready(positionwise_feed_forward(x, params_bf16))
    assert y_bf.shape == (B, S, d_model) and y_bf.dtype == x.dtype
    assert jnp.allclose(y_bf, ref, atol=1e-1, rtol=1e-1), "bf16 mismatch vs reference"

    # Ragged token count (B*S not a multiple of the row tile / alignment).
    B2, S2 = 3, 5
    xr = jax.random.normal(kx2, (B2, S2, d_model), jnp.float32)
    refr = _ref_ffn(xr, w1, b1, w2, b2)
    yr = jax.block_until_ready(positionwise_feed_forward(xr, params_f32))
    assert jnp.allclose(yr, refr, atol=1e-3, rtol=1e-3), "ragged mismatch vs reference"

    # ---- config 2: non-128 d_model, multi-tile d_ff reduction, multiple row tiles --
    d_model2, d_ff2 = 48, 320
    w1b, b1b, w2b, b2b = _init_params(kp2, d_model2, d_ff2)
    params2 = prepare_ffn_params(w1b, b1b, w2b, b2b,
                                 compute_dtype=jnp.float32, d_ff_tile=128)
    B3, S3 = 6, 8
    x3 = jax.random.normal(kx3, (B3, S3, d_model2), jnp.float32)
    ref3 = _ref_ffn(x3, w1b, b1b, w2b, b2b)
    y3 = jax.block_until_ready(positionwise_feed_forward(x3, params2, tm_max=16))
    assert y3.shape == (B3, S3, d_model2)
    assert jnp.allclose(y3, ref3, atol=1e-3, rtol=1e-3), "tiled-reduction mismatch vs reference"

    print("KERNEL_OK")
</pallas_src>

<mosaic_0001>
module attributes {stable_mosaic.version = 11 : i64} {
  func.func @_ffn_kernel(%arg0: i32, %arg1: i32, %arg2: memref<16x32xf32, #tpu.memory_space<vmem>>, %arg3: memref<32x128xf32, #tpu.memory_space<vmem>>, %arg4: memref<1x128xf32, #tpu.memory_space<vmem>>, %arg5: memref<128x128xf32, #tpu.memory_space<vmem>>, %arg6: memref<1x128xf32, #tpu.memory_space<vmem>>, %arg7: memref<16x128xf32, #tpu.memory_space<vmem>>, %arg8: memref<16x128xf32, #tpu.memory_space<vmem>>) attributes {dimension_semantics = [#tpu.dimension_semantics<parallel>, #tpu.dimension_semantics<arbitrary>], iteration_bounds = array<i64: 1, 1>, scalar_prefetch = 0 : i64, scratch_operands = 1 : i64, tpu.core_type = #tpu.core_type<tc>, window_params = [{transform_indices = @transform_0, window_bounds = array<i64: 16, 32>}, {transform_indices = @transform_1, window_bounds = array<i64: 32, 128>}, {transform_indices = @transform_2, window_bounds = array<i64: 1, 128>}, {transform_indices = @transform_3, window_bounds = array<i64: 128, 128>}, {pipeline_mode = #tpu.pipeline_mode<synchronous>, transform_indices = @transform_4, window_bounds = array<i64: 1, 128>}, {transform_indices = @transform_5, window_bounds = array<i64: 16, 128>}]} {
    %c0_i32 = arith.constant 0 : i32
    %0 = arith.cmpi eq, %arg1, %c0_i32 : i32
    %1 = arith.extui %0 : i1 to i32
    %c0_i32_0 = arith.constant 0 : i32
    %2 = arith.cmpi ne, %1, %c0_i32_0 : i32
    scf.if %2 {
      %cst_16 = arith.constant 0.000000e+00 : f32
      %19 = vector.broadcast %cst_16 : f32 to vector<16x128xf32>
      %c0_17 = arith.constant 0 : index
      %c0_18 = arith.constant 0 : index
      %20 = vector.load %arg8[%c0_17, %c0_18] : memref<16x128xf32, #tpu.memory_space<vmem>>, vector<16x128xf32>
      tpu.vector_store %arg8[%c0_17, %c0_18], %19 {strides = array<i32>} : memref<16x128xf32, #tpu.memory_space<vmem>>, vector<16x128xf32>,
    } else {
    }
    %c0 = arith.constant 0 : index
    %c0_1 = arith.constant 0 : index
    %3 = vector.load %arg2[%c0, %c0_1] : memref<16x32xf32, #tpu.memory_space<vmem>>, vector<16x32xf32>
    %c0_2 = arith.constant 0 : index
    %c0_3 = arith.constant 0 : index
    %4 = vector.load %arg3[%c0_2, %c0_3] : memref<32x128xf32, #tpu.memory_space<vmem>>, vector<32x128xf32>
    %cst = arith.constant dense<0.000000e+00> : vector<16x128xf32>
    %5 = tpu.matmul %3, %4, %cst {dimension_numbers = #tpu.dot_dimension_numbers<[1], [0], [0], [1], [0, 0, 1, 1], [], []>} : vector<16x32xf32>, vector<32x128xf32>, vector<16x128xf32> -> vector<16x128xf32>
    %c0_4 = arith.constant 0 : index
    %c0_5 = arith.constant 0 : index
    %6 = vector.load %arg4[%c0_4, %c0_5] : memref<1x128xf32, #tpu.memory_space<vmem>>, vector<1x128xf32>
    %7 = vector.broadcast %6 : vector<1x128xf32> to vector<16x128xf32>
    %8 = arith.addf %5, %7 : vector<16x128xf32>
    %cst_6 = arith.constant 0.000000e+00 : f32
    %9 = vector.broadcast %cst_6 : f32 to vector<16x128xf32>
    %10 = arith.maximumf %8, %9 : vector<16x128xf32>
    %c0_7 = arith.constant 0 : index
    %c0_8 = arith.constant 0 : index
    %11 = vector.load %arg8[%c0_7, %c0_8] : memref<16x128xf32, #tpu.memory_space<vmem>>, vector<16x128xf32>
    %c0_9 = arith.constant 0 : index
    %c0_10 = arith.constant 0 : index
    %12 = vector.load %arg5[%c0_9, %c0_10] : memref<128x128xf32, #tpu.memory_space<vmem>>, vector<128x128xf32>
    %cst_11 = arith.constant dense<0.000000e+00> : vector<16x128xf32>
    %13 = tpu.matmul %10, %12, %cst_11 {dimension_numbers = #tpu.dot_dimension_numbers<[1], [0], [0], [1], [0, 0, 1, 1], [], []>} : vector<16x128xf32>, vector<128x128xf32>, vector<16x128xf32> -> vector<16x128xf32>
    %14 = arith.addf %11, %13 : vector<16x128xf32>
    %c0_12 = arith.constant 0 : index
    %c0_13 = arith.constant 0 : index
    %15 = vector.load %arg8[%c0_12, %c0_13] : memref<16x128xf32, #tpu.memory_space<vmem>>, vector<16x128xf32>
    tpu.vector_store %arg8[%c0_12, %c0_13], %14 {strides = array<i32>} : memref<16x128xf32, #tpu.memory_space<vmem>>, vector<16x128xf32>,
    %c0_i32_14 = arith.constant 0 : i32
    %16 = arith.cmpi eq, %arg1, %c0_i32_14 : i32
    %17 = arith.extui %16 : i1 to i32
    %c0_i32_15 = arith.constant 0 : i32
    %18 = arith.cmpi ne, %17, %c0_i32_15 : i32
    scf.if %18 {
      %c0_16 = arith.constant 0 : index
      %c0_17 = arith.constant 0 : index
      %19 = vector.load %arg8[%c0_16, %c0_17] : memref<16x128xf32, #tpu.memory_space<vmem>>, vector<16x128xf32>
      %c0_18 = arith.constant 0 : index
      %c0_19 = arith.constant 0 : index
      %20 = vector.load %arg6[%c0_18, %c0_19] : memref<1x128xf32, #tpu.memory_space<vmem>>, vector<1x128xf32>
      %21 = vector.broadcast %20 : vector<1x128xf32> to vector<16x128xf32>
      %22 = arith.addf %19, %21 : vector<16x128xf32>
      %c0_20 = arith.constant 0 : index
      %c0_21 = arith.constant 0 : index
      %23 = vector.load %arg7[%c0_20, %c0_21] : memref<16x128xf32, #tpu.memory_space<vmem>>, vector<16x128xf32>
      tpu.vector_store %arg7[%c0_20, %c0_21], %22 {strides = array<i32>} : memref<16x128xf32, #tpu.memory_space<vmem>>, vector<16x128xf32>,
    } else {
    }
    return
  }
  func.func @transform_0(%arg0: i32, %arg1: i32) -> (i32, i32) {
    %c0_i32 = arith.constant 0 : i32
    %c0_i32_0 = arith.constant 0 : i32
    return %arg0, %c0_i32 : i32, i32
  }
  func.func @transform_1(%arg0: i32, %arg1: i32) -> (i32, i32) {
    %c0_i32 = arith.constant 0 : i32
    %c0_i32_0 = arith.constant 0 : i32
    return %c0_i32, %arg1 : i32, i32
  }
  func.func @transform_2(%arg0: i32, %arg1: i32) -> (i32, i32) {
    %c0_i32 = arith.constant 0 : i32
    %c0_i32_0 = arith.constant 0 : i32
    return %c0_i32, %arg1 : i32, i32
  }
  func.func @transform_3(%arg0: i32, %arg1: i32) -> (i32, i32) {
    %c0_i32 = arith.constant 0 : i32
    %c0_i32_0 = arith.constant 0 : i32
    return %arg1, %c0_i32 : i32, i32
  }
  func.func @transform_4(%arg0: i32, %arg1: i32) -> (i32, i32) {
    %c0_i32 = arith.constant 0 : i32
    %c0_i32_0 = arith.constant 0 : i32
    %c0_i32_1 = arith.constant 0 : i32
    return %c0_i32, %c0_i32_0 : i32, i32
  }
  func.func @transform_5(%arg0: i32, %arg1: i32) -> (i32, i32) {
    %c0_i32 = arith.constant 0 : i32
    %c0_i32_0 = arith.constant 0 : i32
    return %arg0, %c0_i32 : i32, i32
  }
}

</mosaic_0001>

<llo_original>
// kernel: tpu_custom_call.1
$region0: #{tpu_custom_call.1}
  #allocation0 [shape = 'u32[]', space=smem, size = 0x4, offset = 0x4, fixed_abs, tag = 'smem constant byte address 0x4 - core index']
  #allocation1 [shape = 'u32[72,128]{1,0:T(1,128)}', space=vmem, size = 0x9000, scoped, tag = 'internal scratch']
  #allocation2 [shape = 'f32[16,128]{1,0:T(8,128)}', space=vmem, size = 0x2000, scoped, tag = 'scratch operand']
  %s0 = inlined_call_operand.hbm [shape: f32[16,32], index: 0, kind: input, shape index: {}]
  %s1 = inlined_call_operand.hbm [shape: f32[32,128], index: 1, kind: input, shape index: {}]
  %s2 = inlined_call_operand.vmem [shape: f32[1,128], index: 2, kind: input, shape index: {}]
  %s3 = inlined_call_operand.hbm [shape: f32[128,128], index: 3, kind: input, shape index: {}]
  %s4 = inlined_call_operand.vmem [shape: f32[1,128], index: 4, kind: input, shape index: {}]
  %s5 = inlined_call_operand.hbm [shape: f32[16,128], index: 5, kind: output, shape index: {}]
  %s6 = sld [smem:[#allocation0]]
  $region50: #{tpu_custom_call.1} parent=0
    _
  %s8 = ssub.s32 1, %s6
  %s9 = scalar_select 0, %s8, %s6
  $region1: #{tpu_custom_call.1} parent=0
    #allocation3 [shape = 'u8[8192]{0}', space=vmem, size = 0x2000, scoped, tag = 'input window, operand 0, single buffered']
    #allocation4 [shape = 's32[1]{0}', space=sflag, size = 0x4, scoped, tag = 'scoped memory for tpu_custom_call.1']
    #allocation5 [shape = 's32[1]{0}', space=sflag, size = 0x4, scoped, tag = 'scoped memory for tpu_custom_call.1']
    #allocation6 [shape = 'u8[16384]{0}', space=vmem, size = 0x4000, scoped, tag = 'input window, operand 1, single buffered']
    #allocation7 [shape = 's32[1]{0}', space=sflag, size = 0x4, scoped, tag = 'scoped memory for tpu_custom_call.1']
    #allocation8 [shape = 'u8[65536]{0}', space=vmem, size = 0x10000, scoped, tag = 'input window, operand 3, single buffered']
    #allocation9 [shape = 'u8[8192]{0}', space=vmem, size = 0x2000, scoped, tag = 'output window, operand 0, single buffered']
    %10 = vsyncpa [#allocation4], 0
    %11 = vsyncpa [#allocation7], 0
    %12 = vsyncpa [#allocation5], 0
    // Predicated region
    $region2: #{tpu_custom_call.1} parent=1 // pred_check
      _
    $region3: #{tpu_custom_call.1} parent=1 // pred_check_branch
      %14 = sbr.rel (0) target = $region5
    $region4: #{tpu_custom_call.1} parent=1 // pred_region
      %16 = vsyncadd [#allocation4], 0
      %s17 = sshll.u32 %s0, 4
      %s18 = int_to_ptr.hbm [resolvable:$true] %s17
      %s19 = sshll.u32 [#allocation3], 4
      %s20 = int_to_ptr.vmem [resolvable:$true] %s19
      %25 = dma.hbm_to_vmem [thread:$0]  %s18, 256, %s20, [#allocation4], 128, 128, 8
    $region5: #{tpu_custom_call.1} parent=1 // pred_fallthru
      _
    // Predicated region
    $region6: #{tpu_custom_call.1} parent=1 // pred_check
      _
    $region7: #{tpu_custom_call.1} parent=1 // pred_check_branch
      %27 = sbr.rel (0) target = $region9
    $region8: #{tpu_custom_call.1} parent=1 // pred_region
      %29 = vsyncadd [#allocation7], 0
      %s30 = sshll.u32 %s1, 4
      %s31 = int_to_ptr.hbm [resolvable:$true] %s30
      %s32 = sshll.u32 [#allocation6], 4
      %s33 = int_to_ptr.vmem [resolvable:$true] %s32
      %38 = dma.hbm_to_vmem [thread:$0]  %s31, 512, %s33, [#allocation7], 128, 128, 8
    $region9: #{tpu_custom_call.1} parent=1 // pred_fallthru
      _
    // Predicated region
    $region10: #{tpu_custom_call.1} parent=1 // pred_check
      _
    $region11: #{tpu_custom_call.1} parent=1 // pred_check_branch
      %40 = sbr.rel (0) target = $region13
    $region12: #{tpu_custom_call.1} parent=1 // pred_region
      _
    $region13: #{tpu_custom_call.1} parent=1 // pred_fallthru
      _
    // Predicated region
    $region14: #{tpu_custom_call.1} parent=1 // pred_check
      _
    $region15: #{tpu_custom_call.1} parent=1 // pred_check_branch
      %42 = sbr.rel (0) target = $region17
    $region16: #{tpu_custom_call.1} parent=1 // pred_region
      %44 = vsyncadd [#allocation7], 0
      %s45 = sshll.u32 %s3, 4
      %s46 = int_to_ptr.hbm [resolvable:$true] %s45
      %s47 = sshll.u32 [#allocation8], 4
      %s48 = int_to_ptr.vmem [resolvable:$true] %s47
      %53 = dma.hbm_to_vmem [thread:$0]  %s46, 2048, %s48, [#allocation7], 128, 128, 8
    $region17: #{tpu_custom_call.1} parent=1 // pred_fallthru
      _
    // Predicated region
    $region18: #{tpu_custom_call.1} parent=1 // pred_check
      _
    $region19: #{tpu_custom_call.1} parent=1 // pred_check_branch
      %55 = sbr.rel (0) target = $region21
    $region20: #{tpu_custom_call.1} parent=1 // pred_region
      _
    $region21: #{tpu_custom_call.1} parent=1 // pred_fallthru
      _
    // Predicated region
    $region22: #{tpu_custom_call.1} parent=1 // pred_check
      _
    $region23: #{tpu_custom_call.1} parent=1 // pred_check_branch
      %57 = sbr.rel (0) target = $region25
    $region24: #{tpu_custom_call.1} parent=1 // pred_region
      %59 = dma.done [#allocation4], 256
    $region25: #{tpu_custom_call.1} parent=1 // pred_fallthru
      _
    // Predicated region
    $region26: #{tpu_custom_call.1} parent=1 // pred_check
      _
    $region27: #{tpu_custom_call.1} parent=1 // pred_check_branch
      %61 = sbr.rel (0) target = $region29
    $region28: #{tpu_custom_call.1} parent=1 // pred_region
      %63 = dma.done [#allocation7], 512
    $region29: #{tpu_custom_call.1} parent=1 // pred_fallthru
      _
    // Predicated region
    $region30: #{tpu_custom_call.1} parent=1 // pred_check
      _
    $region31: #{tpu_custom_call.1} parent=1 // pred_check_branch
      %65 = sbr.rel (0) target = $region33
    $region32: #{tpu_custom_call.1} parent=1 // pred_region
      %67 = dma.done [#allocation7], 2048
    $region33: #{tpu_custom_call.1} parent=1 // pred_fallthru
      _
    %p68 = scmp.eq.s32.totalorder 0, 0
    // Predicated region
    $region34: #{tpu_custom_call.1} parent=1 // pred_check
      %p69 = pneg %p68
    $region35: #{tpu_custom_call.1} parent=1 // pred_check_branch
      %71 = sbr.rel (%p69) target = $region37
    $region36: #{tpu_custom_call.1} parent=1 // pred_region
      %72 = vst [vmem:[#allocation2] sm:$0xff] 0.0
      %73 = vst [vmem:[#allocation2 + $0x8] sm:$0xff] 0.0
    $region37: #{tpu_custom_call.1} parent=1 // pred_fallthru
      _
    %v74 = vld [vmem:[#allocation3] sm:$0xff]
    %v75 = vld [vmem:[#allocation3 + $0x8] sm:$0xff]
    %v76 = vld [vmem:[#allocation6] sm:$0xff]
    %v77 = vld [vmem:[#allocation6 + $0x8] sm:$0xff]
    %v78 = vld [vmem:[#allocation6 + $0x10] sm:$0xff]
    %v79 = vld [vmem:[#allocation6 + $0x18] sm:$0xff]
    %v80 = vld [vmem:[%s2] sm:$0x1]
    %v82 = vperm.slane %v80, 0
    %vm84 = vcmask 261120
    %v86 = vsel %vm84, %v74, 0
    %v89 = vsel %vm84, %v75, 0
    %91 = vmatpush.msra.mxu0 0.0
    %92 = vmatpush.msra.mxu0 0.0
    %93 = vmatpush.msra.mxu0 0.0
    %94 = vmatpush.msra.mxu0 0.0
    %95 = vmatpush.msra.mxu0 0.0
    %96 = vmatpush.msra.mxu0 0.0
    %97 = vmatpush.msra.mxu0 0.0
    %98 = vmatpush.msra.mxu0 0.0
    %99 = vmatpush.msra.mxu0 0.0
    %100 = vmatpush.msra.mxu0 0.0
    %101 = vmatpush.msra.mxu0 0.0
    %102 = vmatpush.msra.mxu0 0.0
    %103 = vmatpush.msra.mxu0 %v79
    %104 = vmatpush.msra.mxu0 %v78
    %105 = vmatpush.msra.mxu0 %v77
    %106 = vmatpush.msra.mxu0 %v76
    %107 = vmatmul.f32.gmra.mxu0 %v86
    %v108 = vpop.f32.mrf.mxu0
    %v109 = vadd.f32 %v82, %v108
    %110 = vmatmul.f32.gmra.mxu0 %v89
    %v111 = vpop.f32.mrf.mxu0
    %v112 = vadd.f32 %v82, %v111
    %113 = vdwg.mxu0
    %v114 = vmax.f32 %v109, 0.0
    %v115 = vmax.f32 %v112, 0.0
    %v116 = vld [vmem:[#allocation2] sm:$0xff]
    %v117 = vld [vmem:[#allocation2 + $0x8] sm:$0xff]
    %v118 = vld [vmem:[#allocation8] sm:$0xff]
    %v119 = vld [vmem:[#allocation8 + $0x8] sm:$0xff]
    %v120 = vld [vmem:[#allocation8 + $0x10] sm:$0xff]
    %v121 = vld [vmem:[#allocation8 + $0x18] sm:$0xff]
    %v122 = vld [vmem:[#allocation8 + $0x20] sm:$0xff]
    %v123 = vld [vmem:[#allocation8 + $0x28] sm:$0xff]
    %v124 = vld [vmem:[#allocation8 + $0x30] sm:$0xff]
    %v125 = vld [vmem:[#allocation8 + $0x38] sm:$0xff]
    %v126 = vld [vmem:[#allocation8 + $0x40] sm:$0xff]
    %v127 = vld [vmem:[#allocation8 + $0x48] sm:$0xff]
    %v128 = vld [vmem:[#allocation8 + $0x50] sm:$0xff]
    %v129 = vld [vmem:[#allocation8 + $0x58] sm:$0xff]
    %v130 = vld [vmem:[#allocation8 + $0x60] sm:$0xff]
    %v131 = vld [vmem:[#allocation8 + $0x68] sm:$0xff]
    %v132 = vld [vmem:[#allocation8 + $0x70] sm:$0xff]
    %v133 = vld [vmem:[#allocation8 + $0x78] sm:$0xff]
    %134 = vmatpush.msra.mxu0 %v133
    %135 = vmatpush.msra.mxu0 %v132
    %136 = vmatpush.msra.mxu0 %v131
    %137 = vmatpush.msra.mxu0 %v130
    %138 = vmatpush.msra.mxu0 %v129
    %139 = vmatpush.msra.mxu0 %v128
    %140 = vmatpush.msra.mxu0 %v127
    %141 = vmatpush.msra.mxu0 %v126
    %142 = vmatpush.msra.mxu0 %v125
    %143 = vmatpush.msra.mxu0 %v124
    %144 = vmatpush.msra.mxu0 %v123
    %145 = vmatpush.msra.mxu0 %v122
    %146 = vmatpush.msra.mxu0 %v121
    %147 = vmatpush.msra.mxu0 %v120
    %148 = vmatpush.msra.mxu0 %v119
    %149 = vmatpush.msra.mxu0 %v118
    %150 = vmatmul.f32.gmra.mxu0 %v114
    %v151 = vpop.f32.mrf.mxu0
    %v152 = vadd.f32 0.0, %v151
    %153 = vmatmul.f32.gmra.mxu0 %v115
    %v154 = vpop.f32.mrf.mxu0
    %v155 = vadd.f32 0.0, %v154
    %156 = vdwg.mxu0
    %v157 = vadd.f32 %v116, %v152
    %v158 = vadd.f32 %v117, %v155
    %159 = vst [vmem:[#allocation2] sm:$0xff] %v157
    %160 = vst [vmem:[#allocation2 + $0x8] sm:$0xff] %v158
    // Predicated region
    $region38: #{tpu_custom_call.1} parent=1 // pred_check
      %p161 = pneg %p68
    $region39: #{tpu_custom_call.1} parent=1 // pred_check_branch
      %163 = sbr.rel (%p161) target = $region41
    $region40: #{tpu_custom_call.1} parent=1 // pred_region
      %v164 = vld [vmem:[#allocation2] sm:$0xff]
      %v165 = vld [vmem:[#allocation2 + $0x8] sm:$0xff]
      %v166 = vld [vmem:[%s4] sm:$0x1]
      %v168 = vperm.slane %v166, 0
      %v170 = vadd.f32 %v164, %v168
      %v171 = vadd.f32 %v165, %v168
      %172 = vst [vmem:[#allocation9] sm:$0xff] %v170
      %173 = vst [vmem:[#allocation9 + $0x8] sm:$0xff] %v171
    $region41: #{tpu_custom_call.1} parent=1 // pred_fallthru
      _
    // Predicated region
    $region42: #{tpu_custom_call.1} parent=1 // pred_check
      _
    $region43: #{tpu_custom_call.1} parent=1 // pred_check_branch
      %175 = sbr.rel (0) target = $region45
    $region44: #{tpu_custom_call.1} parent=1 // pred_region
      %177 = vsyncadd [#allocation5], 0
      %s178 = sshll.u32 [#allocation9], 4
      %s179 = int_to_ptr.vmem [resolvable:$true] %s178
      %s180 = sshll.u32 %s5, 4
      %s181 = int_to_ptr.hbm [resolvable:$true] %s180
      %186 = dma.vmem_to_hbm [thread:$0]  %s179, 256, %s181, [#allocation5], 128, 128, 8
    $region45: #{tpu_custom_call.1} parent=1 // pred_fallthru
      _
    // Predicated region
    $region46: #{tpu_custom_call.1} parent=1 // pred_check
      _
    $region47: #{tpu_custom_call.1} parent=1 // pred_check_branch
      %188 = sbr.rel (0) target = $region49
    $region48: #{tpu_custom_call.1} parent=1 // pred_region
      %190 = dma.done [#allocation5], 256
    $region49: #{tpu_custom_call.1} parent=1 // pred_fallthru
      _
    %191 = vsyncpa [#allocation4], 1
    %192 = vsyncpa [#allocation7], 1
    %193 = vsyncpa [#allocation5], 1

</llo_original>
